<compile_context>
chip_gen: v5e
topology: v5e:2x2
jax: 0.10.0
libtpu: 0.0.40
codegen_flags: <defaults>
</compile_context>

<pallas_src>
import jax
import jax.numpy as jnp
from jax.experimental import pallas as pl
from jax.experimental.pallas import tpu as pltpu


# Cap on the spatial (lane) tile.  Double-buffered x+out blocks cost about
# 2 * 2 * tm * (Cin + Cout*4) * 4 bytes; at tm=8192 and typical U-Net channel
# counts this is a few MiB -- well inside the scoped-VMEM limit on v5e/v6e/v7x.
_TM_CAP = 8192


def _deconv_kernel(x_ref, w_ref, b_ref, o_ref):
    # x_ref: (1, Cin, tm)   w_ref: (Cout*4, Cin)   b_ref: (Cout*4, 1)
    # o_ref: (1, Cout*4, tm)
    acc = jnp.dot(w_ref[...], x_ref[0], preferred_element_type=jnp.float32)
    o_ref[0] = (acc + b_ref[...]).astype(o_ref.dtype)


def up_concat(inputs, down_outputs, weight, bias):
    """Forward of UpConcat.

    inputs:        (N, Cin, H, W)        NCHW, like PyTorch
    down_outputs:  (N, Cd, 2H, 2W)
    weight:        (Cin, Cout, 2, 2)     ConvTranspose2d weight layout
    bias:          (Cout,)
    returns:       (N, Cd + Cout, 2H, 2W)
    """
    N, Cin, H, W = inputs.shape
    Cout = weight.shape[1]
    Kw = Cout * 4
    HW = H * W

    # NCHW already has the spatial axis contiguous & last: no transpose needed.
    x = inputs.reshape(N, Cin, HW)
    # Weight -> (Cout*4, Cin); row r = co*4 + kh*2 + kw.  Tiny, negligible cost.
    w_t = jnp.transpose(weight.reshape(Cin, Kw), (1, 0))
    # Bias broadcast over the 4 taps of each output channel, as a column.
    b_col = jnp.repeat(bias, 4).reshape(Kw, 1)

    # Spatial (lane) tile: either the full spatial extent (always a legal block,
    # even if not a multiple of 128) or a 128-multiple capped by the VMEM budget;
    # the cdiv grid masks any ragged tail.
    tm = HW if HW <= _TM_CAP else _TM_CAP

    grid = (N, pl.cdiv(HW, tm))

    out_flat = pl.pallas_call(
        _deconv_kernel,
        out_shape=jax.ShapeDtypeStruct((N, Kw, HW), inputs.dtype),
        grid_spec=pltpu.PrefetchScalarGridSpec(
            num_scalar_prefetch=0,
            grid=grid,
            in_specs=[
                pl.BlockSpec((1, Cin, tm), lambda n, s: (n, 0, s)),
                pl.BlockSpec((Kw, Cin), lambda n, s: (0, 0)),
                pl.BlockSpec((Kw, 1), lambda n, s: (0, 0)),
            ],
            out_specs=pl.BlockSpec((1, Kw, tm), lambda n, s: (n, 0, s)),
        ),
        compiler_params=pltpu.CompilerParams(
            dimension_semantics=("parallel", "parallel"),
            vmem_limit_bytes=32 * 1024 * 1024,
        ),
    )(x, w_t, b_col)

    # Pixel-shuffle scatter (N, Cout, kh, kw, H, W) -> (N, Cout, 2H, 2W) and the
    # channel concat are pure memory movement; left to XLA (fused under jit).
    # TODO(synk): fold the kh/kw lane interleave + concat into the kernel's output
    # BlockSpec to save one more HBM pass over the deconv output.
    y = out_flat.reshape(N, Cout, 2, 2, H, W)
    y = jnp.transpose(y, (0, 1, 4, 2, 5, 3)).reshape(N, Cout, 2 * H, 2 * W)
    return jnp.concatenate([down_outputs, y], axis=1)


def _reference(inputs, down_outputs, weight, bias):
    # Pure-jnp reference for ConvTranspose2d(k=2, s=2) + concat.
    N, Cin, H, W = inputs.shape
    Cout = weight.shape[1]
    y = jnp.einsum("nihw,iokl->nohkwl", inputs, weight)
    y = y.reshape(N, Cout, 2 * H, 2 * W) + bias[None, :, None, None]
    return jnp.concatenate([down_outputs, y], axis=1)


if __name__ == "__main__":
    key = jax.random.PRNGKey(0)
    k1, k2, k3, k4 = jax.random.split(key, 4)

    # Small shapes consistent with the module: in_feat=8, out_feat=4.
    N, Cin, Cout, H, W = 2, 8, 4, 16, 16
    inputs = jax.random.normal(k1, (N, Cin, H, W), dtype=jnp.float32)
    down_outputs = jax.random.normal(k2, (N, Cout, 2 * H, 2 * W), dtype=jnp.float32)
    weight = jax.random.normal(k3, (Cin, Cout, 2, 2), dtype=jnp.float32) * 0.1
    bias = jax.random.normal(k4, (Cout,), dtype=jnp.float32) * 0.1

    fn = jax.jit(up_concat)
    out = jax.block_until_ready(fn(inputs, down_outputs, weight, bias))
    ref = _reference(inputs, down_outputs, weight, bias)

    assert out.shape == (N, 2 * Cout, 2 * H, 2 * W), out.shape
    assert jnp.allclose(out, ref, atol=1e-5, rtol=1e-5), float(jnp.max(jnp.abs(out - ref)))

    # Ragged / odd spatial extent (exercises the full-spatial-block path; no asserts).
    H2, W2 = 5, 7
    x2 = jax.random.normal(k1, (N, Cin, H2, W2), dtype=jnp.float32)
    d2 = jax.random.normal(k2, (N, Cout, 2 * H2, 2 * W2), dtype=jnp.float32)
    out2 = jax.block_until_ready(up_concat(x2, d2, weight, bias))
    ref2 = _reference(x2, d2, weight, bias)
    assert jnp.allclose(out2, ref2, atol=1e-5, rtol=1e-5), float(jnp.max(jnp.abs(out2 - ref2)))

    print("KERNEL_OK")
</pallas_src>

<mosaic_0001>
module attributes {stable_mosaic.version = 11 : i64} {
  func.func @_deconv_kernel(%arg0: i32, %arg1: i32, %arg2: memref<1x8x256xf32, #tpu.memory_space<vmem>>, %arg3: memref<16x8xf32, #tpu.memory_space<vmem>>, %arg4: memref<16x1xf32, #tpu.memory_space<vmem>>, %arg5: memref<1x16x256xf32, #tpu.memory_space<vmem>>) attributes {dimension_semantics = [#tpu.dimension_semantics<parallel>, #tpu.dimension_semantics<parallel>], iteration_bounds = array<i64: 2, 1>, scalar_prefetch = 0 : i64, scratch_operands = 0 : i64, tpu.core_type = #tpu.core_type<tc>, window_params = [{transform_indices = @transform_0, window_bounds = array<i64: 1, 8, 256>}, {pipeline_mode = #tpu.pipeline_mode<synchronous>, transform_indices = @transform_1, window_bounds = array<i64: 16, 8>}, {pipeline_mode = #tpu.pipeline_mode<synchronous>, transform_indices = @transform_2, window_bounds = array<i64: 16, 1>}, {transform_indices = @transform_3, window_bounds = array<i64: 1, 16, 256>}]} {
    %c0 = arith.constant 0 : index
    %c0_0 = arith.constant 0 : index
    %0 = vector.load %arg3[%c0, %c0_0] : memref<16x8xf32, #tpu.memory_space<vmem>>, vector<16x8xf32>
    %c0_1 = arith.constant 0 : index
    %c0_2 = arith.constant 0 : index
    %c0_3 = arith.constant 0 : index
    %1 = vector.load %arg2[%c0_1, %c0_2, %c0_3] : memref<1x8x256xf32, #tpu.memory_space<vmem>>, vector<1x8x256xf32>
    %2 = vector.shape_cast %1 : vector<1x8x256xf32> to vector<8x256xf32>
    %cst = arith.constant dense<0.000000e+00> : vector<16x256xf32>
    %3 = tpu.matmul %0, %2, %cst {dimension_numbers = #tpu.dot_dimension_numbers<[1], [0], [0], [1], [0, 0, 1, 1], [], []>} : vector<16x8xf32>, vector<8x256xf32>, vector<16x256xf32> -> vector<16x256xf32>
    %c0_4 = arith.constant 0 : index
    %c0_5 = arith.constant 0 : index
    %4 = vector.load %arg4[%c0_4, %c0_5] : memref<16x1xf32, #tpu.memory_space<vmem>>, vector<16x1xf32>
    %5 = vector.broadcast %4 : vector<16x1xf32> to vector<16x256xf32>
    %6 = arith.addf %3, %5 : vector<16x256xf32>
    %c0_6 = arith.constant 0 : index
    %c0_7 = arith.constant 0 : index
    %c0_8 = arith.constant 0 : index
    %7 = vector.load %arg5[%c0_6, %c0_7, %c0_8] : memref<1x16x256xf32, #tpu.memory_space<vmem>>, vector<1x16x256xf32>
    %8 = vector.shape_cast %7 : vector<1x16x256xf32> to vector<16x256xf32>
    %9 = vector.shape_cast %6 : vector<16x256xf32> to vector<1x16x256xf32>
    tpu.vector_store %arg5[%c0_6, %c0_7, %c0_8], %9 {strides = array<i32>} : memref<1x16x256xf32, #tpu.memory_space<vmem>>, vector<1x16x256xf32>,
    return
  }
  func.func @transform_0(%arg0: i32, %arg1: i32) -> (i32, i32, i32) {
    %c0_i32 = arith.constant 0 : i32
    %c0_i32_0 = arith.constant 0 : i32
    return %arg0, %c0_i32, %arg1 : i32, i32, i32
  }
  func.func @transform_1(%arg0: i32, %arg1: i32) -> (i32, i32) {
    %c0_i32 = arith.constant 0 : i32
    %c0_i32_0 = arith.constant 0 : i32
    %c0_i32_1 = arith.constant 0 : i32
    return %c0_i32, %c0_i32_0 : i32, i32
  }
  func.func @transform_2(%arg0: i32, %arg1: i32) -> (i32, i32) {
    %c0_i32 = arith.constant 0 : i32
    %c0_i32_0 = arith.constant 0 : i32
    %c0_i32_1 = arith.constant 0 : i32
    return %c0_i32, %c0_i32_0 : i32, i32
  }
  func.func @transform_3(%arg0: i32, %arg1: i32) -> (i32, i32, i32) {
    %c0_i32 = arith.constant 0 : i32
    %c0_i32_0 = arith.constant 0 : i32
    return %arg0, %c0_i32, %arg1 : i32, i32, i32
  }
}

</mosaic_0001>

<llo_original>
// kernel: up_concat.1
$region0: #{up_concat.1}
  #allocation0 [shape = 'u32[]', space=smem, size = 0x4, offset = 0x4, fixed_abs, tag = 'smem constant byte address 0x4 - core index']
  #allocation1 [shape = 'u32[72,128]{1,0:T(1,128)}', space=vmem, size = 0x9000, scoped, tag = 'internal scratch']
  %s0 = inlined_call_operand.vmem [shape: f32[2,8,256], index: 0, kind: input, shape index: {}]
  %s1 = inlined_call_operand.vmem [shape: f32[16,8], index: 1, kind: input, shape index: {}]
  %s2 = inlined_call_operand.vmem [shape: f32[16,1], index: 2, kind: input, shape index: {}]
  %s3 = inlined_call_operand.vmem [shape: f32[2,16,256], index: 3, kind: output, shape index: {}]
  %s4 = sld [smem:[#allocation0]]
  $region45: #{up_concat.1} parent=0
    _
  %s6 = ssub.s32 1, %s4
  %s7 = scalar_select 0, %s6, %s4
  loop: start=0, step=1, limit=4
  $region2: #{up_concat.1} parent=0 // loop_pre_header
    _
  $region3: #{up_concat.1} parent=0 // loop_header
    %s9 = sphi 0, %s13
    %p10 = scmp.ge.s32.totalorder %s9, 4
    %s16 = sphi 0, %s28
    %s17 = sphi 0, %s24
    %s18 = sphi 0, %s16
    %s19 = sphi 0, %s17
    %s20 = sphi 0, %s18
    %s21 = sphi 0, %s19
    %s33 = sphi 0, %s35
    %s36 = sphi 0, %s33
    %s37 = sphi 0, %s36
    %s53 = sphi 0, %s37
    %s57 = sphi 0, %s57
    %s59 = sphi 0, %s57
    %s60 = sphi 0, %s59
    %s74 = sphi 0, %s60
    %s78 = sphi 0, %s78
    %s80 = sphi 0, %s78
    %s81 = sphi 0, %s80
    %s95 = sphi 0, %s81
    %s103 = sphi 0, %s105
    %s106 = sphi 0, %s103
    %s107 = sphi 0, %s106
    %s123 = sphi 0, %s107
  $region4: #{up_concat.1} parent=0 // loop_header_branch
    %12 = sbr.rel (%p10) target = $region8
  $region5: #{up_concat.1} parent=0 // loop_body
    %s14 = ssub.s32 %s9, 1
    %s15 = ssub.s32 %s9, 2
    %s22 = sadd.s32 1, %s17
    %p23 = scmp.ge.s32.totalorder %s22, 1
    %s24 = scalar_select %p23, 0, %s22
    %s25 = sadd.s32 1, %s16
    %s26 = scalar_select %p23, %s25, %s16
    %p27 = scmp.ge.s32.totalorder %s26, 2
    %s28 = scalar_select %p27, 0, %s26
    %s29 = ssub.s32 %s16, %s28
    %s30 = ssub.s32 %s17, %s24
    %s31 = sor.u32 %s29, %s30
    %p32 = scmp.eq.s32.totalorder %s31, 0
    %s34 = sadd.s32 %s33, 1
    %s35 = scalar_select %p32, %s33, %s34
    %p38 = pneg %p32
    %p39 = scmp.eq.s32.totalorder %s9, 1
    %p40 = por %p38, %p39
    %p41 = scmp.ne.s32.totalorder %s33, %s36
    %p42 = scmp.eq.s32.totalorder %s9, 0
    %p43 = por %p41, %p42
    %p44 = scmp.ne.s32.totalorder %s33, %s36
    %p45 = scmp.eq.s32.totalorder %s14, 1
    %p46 = por %p44, %p45
    %p47 = scmp.ne.s32.totalorder %s36, %s37
    %p48 = scmp.eq.s32.totalorder %s14, 0
    %p49 = por %p47, %p48
    %p50 = scmp.ne.s32.totalorder %s36, %s37
    %p51 = scmp.eq.s32.totalorder %s15, 1
    %p52 = por %p50, %p51
    %p54 = scmp.ne.s32.totalorder %s37, %s53
    %p55 = scmp.eq.s32.totalorder %s15, 0
    %p56 = por %p54, %p55
    %s58 = sadd.s32 %s57, 1
    %p61 = scmp.eq.s32.totalorder %s9, 1
    %p62 = scmp.ne.s32.totalorder %s57, %s59
    %p63 = scmp.eq.s32.totalorder %s9, 0
    %p64 = por %p62, %p63
    %p65 = scmp.ne.s32.totalorder %s57, %s59
    %p66 = scmp.eq.s32.totalorder %s14, 1
    %p67 = por %p65, %p66
    %p68 = scmp.ne.s32.totalorder %s59, %s60
    %p69 = scmp.eq.s32.totalorder %s14, 0
    %p70 = por %p68, %p69
    %p71 = scmp.ne.s32.totalorder %s59, %s60
    %p72 = scmp.eq.s32.totalorder %s15, 1
    %p73 = por %p71, %p72
    %p75 = scmp.ne.s32.totalorder %s60, %s74
    %p76 = scmp.eq.s32.totalorder %s15, 0
    %p77 = por %p75, %p76
    %s79 = sadd.s32 %s78, 1
    %p82 = scmp.eq.s32.totalorder %s9, 1
    %p83 = scmp.ne.s32.totalorder %s78, %s80
    %p84 = scmp.eq.s32.totalorder %s9, 0
    %p85 = por %p83, %p84
    %p86 = scmp.ne.s32.totalorder %s78, %s80
    %p87 = scmp.eq.s32.totalorder %s14, 1
    %p88 = por %p86, %p87
    %p89 = scmp.ne.s32.totalorder %s80, %s81
    %p90 = scmp.eq.s32.totalorder %s14, 0
    %p91 = por %p89, %p90
    %p92 = scmp.ne.s32.totalorder %s80, %s81
    %p93 = scmp.eq.s32.totalorder %s15, 1
    %p94 = por %p92, %p93
    %p96 = scmp.ne.s32.totalorder %s81, %s95
    %p97 = scmp.eq.s32.totalorder %s15, 0
    %p98 = por %p96, %p97
    %s99 = ssub.s32 %s16, %s28
    %s100 = ssub.s32 %s17, %s24
    %s101 = sor.u32 %s99, %s100
    %p102 = scmp.eq.s32.totalorder %s101, 0
    %s104 = sadd.s32 %s103, 1
    %s105 = scalar_select %p102, %s103, %s104
    %p108 = pneg %p102
    %p109 = scmp.eq.s32.totalorder %s9, 1
    %p110 = por %p108, %p109
    %p111 = scmp.ne.s32.totalorder %s103, %s106
    %p112 = scmp.eq.s32.totalorder %s9, 0
    %p113 = por %p111, %p112
    %p114 = scmp.ne.s32.totalorder %s103, %s106
    %p115 = scmp.eq.s32.totalorder %s14, 1
    %p116 = por %p114, %p115
    %p117 = scmp.ne.s32.totalorder %s106, %s107
    %p118 = scmp.eq.s32.totalorder %s14, 0
    %p119 = por %p117, %p118
    %p120 = scmp.ne.s32.totalorder %s106, %s107
    %p121 = scmp.eq.s32.totalorder %s15, 1
    %p122 = por %p120, %p121
    %p124 = scmp.ne.s32.totalorder %s107, %s123
    %p125 = scmp.eq.s32.totalorder %s15, 0
    %p126 = por %p124, %p125
    %p127 = scmp.le.s32.totalorder 1, %s9
    %p128 = scmp.lt.s32.totalorder %s9, 3
    %p129 = pnand %p127, %p128
    %p130 = pneg %p129
    // Predicated region
    $region9: #{up_concat.1} parent=5 // pred_check
      _
    $region10: #{up_concat.1} parent=5 // pred_check_branch
      %132 = sbr.rel (%p129) target = $region12
    $region11: #{up_concat.1} parent=5 // pred_region
      %s133 = ssub.s32 %s9, 1
      // Predicated region
      $region13: #{up_concat.1} parent=11 // pred_check
        %p134 = pneg %p70
      $region14: #{up_concat.1} parent=11 // pred_check_branch
        %136 = sbr.rel (%p134) target = $region16
      $region15: #{up_concat.1} parent=11 // pred_region
        _
      $region16: #{up_concat.1} parent=11 // pred_fallthru
        _
      // Predicated region
      $region17: #{up_concat.1} parent=11 // pred_check
        %p137 = pneg %p91
      $region18: #{up_concat.1} parent=11 // pred_check_branch
        %139 = sbr.rel (%p137) target = $region20
      $region19: #{up_concat.1} parent=11 // pred_region
        _
      $region20: #{up_concat.1} parent=11 // pred_fallthru
        _
    $region12: #{up_concat.1} parent=5 // pred_fallthru
      _
    %p140 = scmp.lt.s32.totalorder %s9, 2
    // Predicated region
    $region21: #{up_concat.1} parent=5 // pred_check
      %p141 = pneg %p140
    $region22: #{up_concat.1} parent=5 // pred_check_branch
      %143 = sbr.rel (%p141) target = $region24
    $region23: #{up_concat.1} parent=5 // pred_region
      // Predicated region
      $region25: #{up_concat.1} parent=23 // pred_check
        %p144 = pneg %p43
      $region26: #{up_concat.1} parent=23 // pred_check_branch
        %146 = sbr.rel (%p144) target = $region28
      $region27: #{up_concat.1} parent=23 // pred_region
        %s147 = smul.u32 2, %s17
        %p148 = scmp.lt.s32.totalorder %s16, 1
        %s149 = scalar_select %p148, %s16, 1
        %p150 = scmp.lt.s32.totalorder %s147, 1
        %s151 = scalar_select %p150, %s147, 1
        %s152 = smul.addr %s149, 2
        %s153 = sadd.s32 %s151, %s152
        %s154 = smul.addr %s153, 8
        %s155 = scalar_lea.vmem %s0, %s154
        %s156 = smul.u32 2, %s17
      $region28: #{up_concat.1} parent=23 // pred_fallthru
        _
    $region24: #{up_concat.1} parent=5 // pred_fallthru
      _
    %p157 = scmp.le.s32.totalorder 1, %s9
    %p158 = scmp.lt.s32.totalorder %s9, 3
    %p159 = pnand %p157, %p158
    %p160 = pneg %p159
    // Predicated region
    $region29: #{up_concat.1} parent=5 // pred_check
      _
    $region30: #{up_concat.1} parent=5 // pred_check_branch
      %162 = sbr.rel (%p159) target = $region32
    $region31: #{up_concat.1} parent=5 // pred_region
      %s163 = ssub.s32 %s9, 1
      %s164 = smul.u32 2, %s19
      %p165 = scmp.lt.s32.totalorder %s18, 1
      %s166 = scalar_select %p165, %s18, 1
      %p167 = scmp.lt.s32.totalorder %s164, 1
      %s168 = scalar_select %p167, %s164, 1
      %s169 = smul.addr %s166, 2
      %s170 = sadd.s32 %s168, %s169
      %s171 = smul.addr %s170, 8
      %s172 = scalar_lea.vmem %s0, %s171
      %p173 = pneg %p49
      %p174 = pneg %p46
      %p175 = pneg %p70
      %p176 = pneg %p67
      %p177 = pneg %p91
      %p178 = pneg %p88
      %p179 = pneg %p119
      %p180 = pneg %p116
      %s181 = smul.u32 2, %s19
      %p182 = scmp.lt.s32.totalorder %s18, 1
      %s183 = scalar_select %p182, %s18, 1
      %p184 = scmp.lt.s32.totalorder %s181, 1
      %s185 = scalar_select %p184, %s181, 1
      %s186 = smul.addr %s183, 4
      %s187 = sadd.s32 %s185, %s186
      %s188 = smul.addr %s187, 8
      %s189 = scalar_lea.vmem %s3, %s188
      %s190 = smul.u32 2, %s19
      %p191 = scmp.lt.s32.totalorder %s18, 1
      %s192 = scalar_select %p191, %s18, 1
      %p193 = scmp.lt.s32.totalorder %s190, 1
      %s194 = scalar_select %p193, %s190, 1
      %s195 = smul.addr %s192, 2
      %s196 = sadd.s32 %s194, %s195
      %s197 = smul.addr %s196, 8
      %s198 = scalar_lea.vmem %s0, %s197
      %s199 = smul.u32 2, %s19
      %s200 = smul.u32 2, %s19
      %p201 = scmp.lt.s32.totalorder %s18, 1
      %s202 = scalar_select %p201, %s18, 1
      %p203 = scmp.lt.s32.totalorder %s200, 1
      %s204 = scalar_select %p203, %s200, 1
      %s205 = smul.addr %s202, 4
      %s206 = sadd.s32 %s204, %s205
      %s207 = smul.addr %s206, 8
      %s208 = scalar_lea.vmem %s3, %s207
      %s209 = smul.u32 2, %s19
      %v210 = vld [vmem:[%s1] sm:$0xff]
      %v211 = vld [vmem:[%s1 + $0x8] sm:$0xff]
      %v212 = vld [vmem:[%s198] sm:$0xff]
      %v213 = vld [vmem:[%s198 + $0x8] sm:$0xff]
      %v214 = vld [vmem:[%s2] sm:$0xff]
      %v215 = vld [vmem:[%s2 + $0x8] sm:$0xff]
      %217 = vset.pattern.permute.xlu0 0
      %218 = vperm.xlu0 %217, %v214
      %v219 = vpop.permute.xlu0 %218
      %222 = vset.pattern.permute.xlu0 0
      %223 = vperm.xlu0 %222, %v215
      %v224 = vpop.permute.xlu0 %223
      %vm226 = vcmask 64512
      %v228 = vsel %vm226, %v210, 0
      %v231 = vsel %vm226, %v211, 0
      %233 = vmatpush.msra.mxu0 0.0
      %234 = vmatpush.msra.mxu0 0.0
      %235 = vmatpush.msra.mxu0 0.0
      %236 = vmatpush.msra.mxu0 0.0
      %237 = vmatpush.msra.mxu0 0.0
      %238 = vmatpush.msra.mxu0 0.0
      %239 = vmatpush.msra.mxu0 0.0
      %240 = vmatpush.msra.mxu0 0.0
      %241 = vmatpush.msra.mxu0 0.0
      %242 = vmatpush.msra.mxu0 0.0
      %243 = vmatpush.msra.mxu0 0.0
      %244 = vmatpush.msra.mxu0 0.0
      %245 = vmatpush.msra.mxu0 0.0
      %246 = vmatpush.msra.mxu0 0.0
      %247 = vmatpush.msra.mxu0 0.0
      %248 = vmatpush.msra.mxu0 %v212
      %249 = vmatmul.f32.gmra.mxu0 %v228
      %v250 = vpop.f32.mrf.mxu0
      %v251 = vadd.f32 %v219, %v250
      %252 = vmatmul.f32.gmra.mxu0 %v231
      %v253 = vpop.f32.mrf.mxu0
      %v254 = vadd.f32 %v224, %v253
      %255 = vdwg.mxu0
      %256 = vmatpush.msra.mxu0 0.0
      %257 = vmatpush.msra.mxu0 0.0
      %258 = vmatpush.msra.mxu0 0.0
      %259 = vmatpush.msra.mxu0 0.0
      %260 = vmatpush.msra.mxu0 0.0
      %261 = vmatpush.msra.mxu0 0.0
      %262 = vmatpush.msra.mxu0 0.0
      %263 = vmatpush.msra.mxu0 0.0
      %264 = vmatpush.msra.mxu0 0.0
      %265 = vmatpush.msra.mxu0 0.0
      %266 = vmatpush.msra.mxu0 0.0
      %267 = vmatpush.msra.mxu0 0.0
      %268 = vmatpush.msra.mxu0 0.0
      %269 = vmatpush.msra.mxu0 0.0
      %270 = vmatpush.msra.mxu0 0.0
      %271 = vmatpush.msra.mxu0 %v213
      %272 = vmatmul.f32.gmra.mxu0 %v228
      %v273 = vpop.f32.mrf.mxu0
      %v274 = vadd.f32 %v219, %v273
      %275 = vmatmul.f32.gmra.mxu0 %v231
      %v276 = vpop.f32.mrf.mxu0
      %v277 = vadd.f32 %v224, %v276
      %278 = vdwg.mxu0
      %279 = vst [vmem:[%s208] sm:$0xff] %v251
      %280 = vst [vmem:[%s208 + $0x8] sm:$0xff] %v274
      %281 = vst [vmem:[%s208 + $0x10] sm:$0xff] %v254
      %282 = vst [vmem:[%s208 + $0x18] sm:$0xff] %v277
      %s283 = smul.u32 2, %s19
      %p284 = scmp.lt.s32.totalorder %s18, 1
      %s285 = scalar_select %p284, %s18, 1
      %p286 = scmp.lt.s32.totalorder %s283, 1
      %s287 = scalar_select %p286, %s283, 1
      %s288 = smul.addr %s285, 4
      %s289 = sadd.s32 %s287, %s288
      %s290 = smul.addr %s289, 8
      %s291 = scalar_lea.vmem %s3, %s290
      // Predicated region
      $region33: #{up_concat.1} parent=31 // pred_check
        %p292 = pneg %p116
      $region34: #{up_concat.1} parent=31 // pred_check_branch
        %294 = sbr.rel (%p292) target = $region36
      $region35: #{up_concat.1} parent=31 // pred_region
        %s295 = smul.u32 2, %s19
      $region36: #{up_concat.1} parent=31 // pred_fallthru
        _
    $region32: #{up_concat.1} parent=5 // pred_fallthru
      _
    %p296 = scmp.le.s32.totalorder 2, %s9
    // Predicated region
    $region37: #{up_concat.1} parent=5 // pred_check
      %p297 = pneg %p296
    $region38: #{up_concat.1} parent=5 // pred_check_branch
      %299 = sbr.rel (%p297) target = $region40
    $region39: #{up_concat.1} parent=5 // pred_region
      %s300 = ssub.s32 %s9, 2
      // Predicated region
      $region41: #{up_concat.1} parent=39 // pred_check
        %p301 = pneg %p122
      $region42: #{up_concat.1} parent=39 // pred_check_branch
        %303 = sbr.rel (%p301) target = $region44
      $region43: #{up_concat.1} parent=39 // pred_region
        %s304 = smul.u32 2, %s21
        %p305 = scmp.lt.s32.totalorder %s20, 1
        %s306 = scalar_select %p305, %s20, 1
        %p307 = scmp.lt.s32.totalorder %s304, 1
        %s308 = scalar_select %p307, %s304, 1
        %s309 = smul.addr %s306, 4
        %s310 = sadd.s32 %s308, %s309
        %s311 = smul.addr %s310, 8
        %s312 = scalar_lea.vmem %s3, %s311
      $region44: #{up_concat.1} parent=39 // pred_fallthru
        _
    $region40: #{up_concat.1} parent=5 // pred_fallthru
      _
  $region6: #{up_concat.1} parent=0 // loop_footer
    %s13 = sadd.s32 1, %s9
  $region7: #{up_concat.1} parent=0 // loop_footer_branch
    %8 = sbr.rel target = $region3
  $region8: #{up_concat.1} parent=0 // loop_exit
    _

</llo_original>
